<compile_context>
chip_gen: v5e
topology: v5e:2x2
jax: 0.10.0
libtpu: 0.0.40
codegen_flags: <defaults>
</compile_context>

<pallas_src>
import functools

import jax
import jax.numpy as jnp
from jax.experimental import pallas as pl
from jax.experimental.pallas import tpu as pltpu


# --------------------------------------------------------------------------
# Kernel body (elementwise, stable softplus, f32 accumulation)
# --------------------------------------------------------------------------
def _softplus_kernel(x_ref, o_ref, *, beta):
    z = x_ref[...].astype(jnp.float32)
    if beta != 1.0:                      # trace-time branch (beta is Python float)
        z = z * beta
    y = jnp.maximum(z, 0.0) + jnp.log1p(jnp.exp(-jnp.abs(z)))
    if beta != 1.0:
        y = y * (1.0 / beta)
    o_ref[...] = y.astype(o_ref.dtype)


def _softplus_jnp(x, beta):
    """Stable softplus in plain jnp (used only for sub-128-element tails)."""
    z = x.astype(jnp.float32)
    if beta != 1.0:
        z = z * beta
    y = jnp.maximum(z, 0.0) + jnp.log1p(jnp.exp(-jnp.abs(z)))
    if beta != 1.0:
        y = y * (1.0 / beta)
    return y.astype(x.dtype)


def _round_up(v, m):
    return ((v + m - 1) // m) * m


def _plan_block_rows(rows, lane_width, itemsize):
    """Pick block_rows (multiple of the packed sublane tile) so that
    (a) one block stays <= ~4 MiB, (b) inputs big enough to benefit get at
    least 2 grid steps (4 above 1 MiB) for pipelining + 2-TC sharding."""
    sublane_mult = 8 * max(1, 4 // itemsize)       # 8 (f32) / 16 (bf16) / 32 (8-bit)
    if rows <= sublane_mult:
        return rows                                # tiny: single full-dim block

    max_block_bytes = 4 << 20                      # in+out double-buffered ~16 MiB
    max_block_rows = max(
        sublane_mult,
        (max_block_bytes // (lane_width * itemsize)) // sublane_mult * sublane_mult,
    )

    total_bytes = rows * lane_width * itemsize
    min_steps = 4 if total_bytes >= (1 << 20) else 2
    steps = max(min_steps, pl.cdiv(rows, max_block_rows))

    block_rows = _round_up(pl.cdiv(rows, steps), sublane_mult)
    block_rows = max(sublane_mult, min(block_rows, max_block_rows))
    if block_rows >= rows:
        block_rows = rows                          # full-dim block is always legal
    return block_rows


# --------------------------------------------------------------------------
# Public wrapper
# --------------------------------------------------------------------------
def softplus(x, beta=1.0):
    """Elementwise softplus matching the PyTorch module:
       forward(x, beta) = 1/beta * log(1 + exp(beta*x))   (stable form)."""
    beta = float(beta)
    orig_shape = x.shape
    orig_dtype = x.dtype
    itemsize = jnp.dtype(orig_dtype).itemsize

    flat = x.reshape(-1)
    n = flat.shape[0]
    if n == 0:
        return x

    # Lane-aligned prefix goes through the Pallas kernel; the (<128-elem) tail
    # is computed with plain jnp — no pad/slice passes over HBM.
    n_main = (n // 128) * 128
    tail = n - n_main

    if n_main == 0:
        y_flat = _softplus_jnp(flat, beta)
        return y_flat.reshape(orig_shape)

    # Widest multiple-of-128 last dim that divides n_main (lane-dense output).
    lane_width = 128
    for w in (4096, 2048, 1024, 512, 256):
        if n_main % w == 0:
            lane_width = w
            break
    rows = n_main // lane_width

    block_rows = _plan_block_rows(rows, lane_width, itemsize)
    grid = (pl.cdiv(rows, block_rows),)

    x_main = flat if tail == 0 else flat[:n_main]
    x2d = x_main.reshape(rows, lane_width)

    kernel = functools.partial(_softplus_kernel, beta=beta)

    y2d = pl.pallas_call(
        kernel,
        out_shape=jax.ShapeDtypeStruct((rows, lane_width), orig_dtype),
        grid=grid,
        in_specs=[pl.BlockSpec((block_rows, lane_width), lambda i: (i, 0))],
        out_specs=pl.BlockSpec((block_rows, lane_width), lambda i: (i, 0)),
        compiler_params=pltpu.CompilerParams(
            dimension_semantics=("parallel",),     # shards steps across v7x's 2 TCs
            vmem_limit_bytes=48 << 20,             # > v5e 16 MiB default, < v7x 64 MiB
        ),
        cost_estimate=pl.CostEstimate(
            flops=5 * n_main,
            transcendentals=2 * n_main,            # exp + log1p per element
            bytes_accessed=2 * n_main * itemsize,
        ),
    )(x2d)

    y_main = y2d.reshape(-1)
    if tail:
        y_tail = _softplus_jnp(flat[n_main:], beta)
        y_flat = jnp.concatenate([y_main, y_tail])
    else:
        y_flat = y_main
    return y_flat.reshape(orig_shape)


# --------------------------------------------------------------------------
# Self-test
# --------------------------------------------------------------------------
if __name__ == "__main__":
    key = jax.random.PRNGKey(0)

    def _ref(x, beta):
        return (1.0 / beta) * jnp.log(1.0 + jnp.exp(beta * x))

    # Main test: module-consistent NCHW shape, beta = 1.
    x = jax.random.normal(key, (2, 4, 16, 16), dtype=jnp.float32)
    y = softplus(x, beta=1.0)
    jax.block_until_ready(y)
    assert y.shape == x.shape and y.dtype == x.dtype
    assert jnp.allclose(y, _ref(x, 1.0), atol=1e-5, rtol=1e-5)

    # Extra sanity: beta != 1 on the same shape.
    y2 = softplus(x, beta=2.0)
    jax.block_until_ready(y2)
    assert jnp.allclose(y2, _ref(x, 2.0), atol=1e-5, rtol=1e-5)

    # Extra sanity: non-128-divisible size (exercises the prefix + jnp-tail path).
    x_odd = jax.random.normal(jax.random.PRNGKey(1), (5, 100), dtype=jnp.float32)
    y_odd = softplus(x_odd, beta=1.0)
    jax.block_until_ready(y_odd)
    assert y_odd.shape == x_odd.shape
    assert jnp.allclose(y_odd, _ref(x_odd, 1.0), atol=1e-5, rtol=1e-5)

    print("KERNEL_OK")
</pallas_src>

<mosaic_0001>
module attributes {stable_mosaic.version = 11 : i64} {
  func.func @_softplus_kernel(%arg0: i32, %arg1: memref<1x2048xf32, #tpu.memory_space<vmem>>, %arg2: memref<1x2048xf32, #tpu.memory_space<vmem>>) attributes {dimension_semantics = [#tpu.dimension_semantics<parallel>], iteration_bounds = array<i64: 1>, scalar_prefetch = 0 : i64, scratch_operands = 0 : i64, tpu.core_type = #tpu.core_type<tc>, window_params = [{transform_indices = @transform_0, window_bounds = array<i64: 1, 2048>}, {transform_indices = @transform_1, window_bounds = array<i64: 1, 2048>}]} {
    %c0 = arith.constant 0 : index
    %c0_0 = arith.constant 0 : index
    %0 = vector.load %arg1[%c0, %c0_0] : memref<1x2048xf32, #tpu.memory_space<vmem>>, vector<1x2048xf32>
    %cst = arith.constant 0.000000e+00 : f32
    %1 = vector.broadcast %cst : f32 to vector<1x2048xf32>
    %2 = arith.maximumf %0, %1 : vector<1x2048xf32>
    %3 = math.absf %0 : vector<1x2048xf32>
    %cst_1 = arith.constant 0.000000e+00 : f32
    %4 = vector.broadcast %cst_1 : f32 to vector<1x2048xf32>
    %5 = arith.subf %4, %3 : vector<1x2048xf32>
    %6 = math.exp %5 : vector<1x2048xf32>
    %7 = math.log1p %6 : vector<1x2048xf32>
    %8 = arith.addf %2, %7 : vector<1x2048xf32>
    %c0_2 = arith.constant 0 : index
    %c0_3 = arith.constant 0 : index
    %9 = vector.load %arg2[%c0_2, %c0_3] : memref<1x2048xf32, #tpu.memory_space<vmem>>, vector<1x2048xf32>
    tpu.vector_store %arg2[%c0_2, %c0_3], %8 {strides = array<i32>} : memref<1x2048xf32, #tpu.memory_space<vmem>>, vector<1x2048xf32>,
    return
  }
  func.func @transform_0(%arg0: i32) -> (i32, i32) {
    %c0_i32 = arith.constant 0 : i32
    %c0_i32_0 = arith.constant 0 : i32
    return %arg0, %c0_i32 : i32, i32
  }
  func.func @transform_1(%arg0: i32) -> (i32, i32) {
    %c0_i32 = arith.constant 0 : i32
    %c0_i32_0 = arith.constant 0 : i32
    return %arg0, %c0_i32 : i32, i32
  }
}

</mosaic_0001>

<llo_original>
// kernel: tpu_custom_call.1
$region0: #{tpu_custom_call.1}
  #allocation0 [shape = 'u32[]', space=smem, size = 0x4, offset = 0x4, fixed_abs, tag = 'smem constant byte address 0x4 - core index']
  #allocation1 [shape = 'u32[72,128]{1,0:T(1,128)}', space=vmem, size = 0x9000, scoped, tag = 'internal scratch']
  %s0 = inlined_call_operand.hbm [shape: f32[1,2048], index: 0, kind: input, shape index: {}]
  %s1 = inlined_call_operand.hbm [shape: f32[1,2048], index: 1, kind: output, shape index: {}]
  %s2 = sld [smem:[#allocation0]]
  $region18: #{tpu_custom_call.1} parent=0
    _
  %s4 = ssub.s32 1, %s2
  %s5 = scalar_select 0, %s4, %s2
  $region1: #{tpu_custom_call.1} parent=0
    #allocation2 [shape = 'u8[8192]{0}', space=vmem, size = 0x2000, scoped, tag = 'input window, operand 0, single buffered']
    #allocation3 [shape = 's32[1]{0}', space=sflag, size = 0x4, scoped, tag = 'scoped memory for tpu_custom_call.1']
    #allocation4 [shape = 's32[1]{0}', space=sflag, size = 0x4, scoped, tag = 'scoped memory for tpu_custom_call.1']
    #allocation5 [shape = 'u8[8192]{0}', space=vmem, size = 0x2000, scoped, tag = 'output window, operand 0, single buffered']
    %6 = vsyncpa [#allocation3], 0
    %7 = vsyncpa [#allocation4], 0
    // Predicated region
    $region2: #{tpu_custom_call.1} parent=1 // pred_check
      _
    $region3: #{tpu_custom_call.1} parent=1 // pred_check_branch
      %9 = sbr.rel (0) target = $region5
    $region4: #{tpu_custom_call.1} parent=1 // pred_region
      %11 = vsyncadd [#allocation3], 0
      %s13 = sshll.u32 %s0, 4
      %s14 = int_to_ptr.hbm [resolvable:$true] %s13
      %s15 = sshll.u32 [#allocation2], 4
      %s16 = int_to_ptr.vmem [resolvable:$true] %s15
      %18 = dma.hbm_to_vmem [thread:$0]  %s14, 256, %s16, [#allocation3]
    $region5: #{tpu_custom_call.1} parent=1 // pred_fallthru
      _
    // Predicated region
    $region6: #{tpu_custom_call.1} parent=1 // pred_check
      _
    $region7: #{tpu_custom_call.1} parent=1 // pred_check_branch
      %20 = sbr.rel (0) target = $region9
    $region8: #{tpu_custom_call.1} parent=1 // pred_region
      %22 = dma.done [#allocation3], 256
    $region9: #{tpu_custom_call.1} parent=1 // pred_fallthru
      _
    %v23 = vld [vmem:[#allocation2] sm:$0xff]
    %v24 = vld [vmem:[#allocation2 + $0x8] sm:$0xff]
    %v25 = vmax.f32 %v23, 0.0
    %v26 = vmax.f32 %v24, 0.0
    %v27 = vand.u32 2147483647, %v23
    %v28 = vand.u32 2147483647, %v24
    %v29 = vsub.f32 0.0, %v27
    %v30 = vsub.f32 0.0, %v28
    %v31 = vmul.f32 %v29, 1.442695
    %v32 = vpow.pop %v31
    %v33 = vmul.f32 %v30, 1.442695
    %v34 = vpow.pop %v33
    %v35 = vadd.f32 %v32, 1.0
    %v36 = vlog2.pop %v35
    %v37 = vmul.f32 %v36, 0.6931472
    %v38 = vmul.f32 -0.5, %v32
    %v39 = vadd.f32 %v38, 1.0
    %v40 = vmul.f32 %v39, %v32
    %v41 = vand.u32 2147483647, %v32
    %vm42 = vcmp.lt.f32.partialorder %v41, 0.0004427343
    %v43 = vsel %vm42, %v40, %v37
    %v44 = vadd.f32 %v34, 1.0
    %v45 = vlog2.pop %v44
    %v46 = vmul.f32 %v45, 0.6931472
    %v47 = vmul.f32 -0.5, %v34
    %v48 = vadd.f32 %v47, 1.0
    %v49 = vmul.f32 %v48, %v34
    %v50 = vand.u32 2147483647, %v34
    %vm51 = vcmp.lt.f32.partialorder %v50, 0.0004427343
    %v52 = vsel %vm51, %v49, %v46
    %v53 = vadd.f32 %v25, %v43
    %v54 = vadd.f32 %v26, %v52
    %55 = vst [vmem:[#allocation5] sm:$0xff] %v53
    %56 = vst [vmem:[#allocation5 + $0x8] sm:$0xff] %v54
    // Predicated region
    $region10: #{tpu_custom_call.1} parent=1 // pred_check
      _
    $region11: #{tpu_custom_call.1} parent=1 // pred_check_branch
      %58 = sbr.rel (0) target = $region13
    $region12: #{tpu_custom_call.1} parent=1 // pred_region
      %60 = vsyncadd [#allocation4], 0
      %s62 = sshll.u32 [#allocation5], 4
      %s63 = int_to_ptr.vmem [resolvable:$true] %s62
      %s64 = sshll.u32 %s1, 4
      %s65 = int_to_ptr.hbm [resolvable:$true] %s64
      %67 = dma.vmem_to_hbm [thread:$0]  %s63, 256, %s65, [#allocation4]
    $region13: #{tpu_custom_call.1} parent=1 // pred_fallthru
      _
    // Predicated region
    $region14: #{tpu_custom_call.1} parent=1 // pred_check
      _
    $region15: #{tpu_custom_call.1} parent=1 // pred_check_branch
      %69 = sbr.rel (0) target = $region17
    $region16: #{tpu_custom_call.1} parent=1 // pred_region
      %71 = dma.done [#allocation4], 256
    $region17: #{tpu_custom_call.1} parent=1 // pred_fallthru
      _
    %72 = vsyncpa [#allocation3], 1
    %73 = vsyncpa [#allocation4], 1

</llo_original>
